<compile_context>
chip_gen: v6e
topology: v6e:2x2x1
jax: 0.10.0
libtpu: 0.0.40
codegen_flags: <defaults>
</compile_context>

<pallas_src>
import functools

import jax
import jax.numpy as jnp
from jax.experimental import pallas as pl
from jax.experimental.pallas import tpu as pltpu


def _netvlad_kernel(x_ref, w_ref, b_ref, c_ref, o_ref, *, eps, mxu_dtype):
    # x_ref: (tT, D)   w_ref: (D, K)   b_ref: (1, K)   c_ref: (K, D)
    # o_ref: (tT, K, D)
    x = x_ref[...].astype(jnp.float32)        # (tT, D)
    w = w_ref[...]                            # (D, K) f32
    bias = b_ref[...]                         # (1, K) f32
    c = c_ref[...]                            # (K, D) f32

    # --- soft-assignment: 1x1 Conv1d == matmul on the MXU, softmax over K ---
    if mxu_dtype is not None:                 # opt-in (v5e): narrow MXU operands only
        logits = jnp.dot(x.astype(mxu_dtype), w.astype(mxu_dtype),
                         preferred_element_type=jnp.float32) + bias
    else:
        logits = jnp.dot(x, w, preferred_element_type=jnp.float32) + bias
    m = jnp.max(logits, axis=-1, keepdims=True)
    e = jnp.exp(logits - m)
    assn = e * pl.reciprocal(jnp.sum(e, axis=-1, keepdims=True), approx=True)  # (tT,K)

    # --- residuals computed directly (no cancellation; reused for the store) ---
    resid = x[:, None, :] - c[None, :, :]                      # (tT, K, D) f32
    resid_sq = jnp.sum(resid * resid, axis=-1)                 # (tT, K)

    # --- F.normalize over D of (assn_k * resid_k):
    #     v_k = resid_k * assn_k / max(assn_k*||resid_k||, eps)
    #     => scale_k = 1/||resid_k||  (normal case)  or  assn_k/eps (degenerate)
    wnorm = assn * jnp.sqrt(resid_sq)                          # (tT, K)
    scale = jnp.where(wnorm > eps,
                      jax.lax.rsqrt(jnp.maximum(resid_sq, 1e-36)),   # EUP rsqrt
                      assn * (1.0 / eps))                      # (tT, K)

    # --- global L2 over the flattened (K*D) descriptor, fused analytically on
    #     the *exact* per-cluster norms:  sum_k ||resid_k*scale_k||^2
    gsq = jnp.sum(resid_sq * scale * scale, axis=-1, keepdims=True)  # (tT, 1)
    total = scale * jax.lax.rsqrt(jnp.maximum(gsq, eps * eps))       # (tT, K)

    # --- single store of the whole output tile (bf16 by default) ---
    o_ref[...] = (resid * total[:, :, None]).astype(o_ref.dtype)


def _vmem_capacity_bytes():
    # Per-TensorCore VMEM (v5e/v6e: 128 MiB, v7x: 64 MiB).  Conservative 64 MiB
    # fallback if the query is unavailable.
    try:
        return int(min(pltpu.get_tpu_info().vmem_capacity_bytes, 128 << 20))
    except Exception:
        return 64 << 20


def _choose_time_tile(T_ds, K, D, *, x_itemsize, out_itemsize, cap_bytes):
    """Largest time tile whose pipelined blocks + f32 temporaries fit VMEM."""
    reserve = 8 << 20                       # params, Mosaic scratch, slack
    usable = max(cap_bytes - reserve, 4 << 20)
    per_row = (2 * x_itemsize * D           # double-buffered input rows
               + 2 * out_itemsize * K * D   # double-buffered output rows
               + 3 * 4 * K * D)             # live f32 (tT,K,D) temps (resid/out)
    tt = usable // per_row
    if tt >= T_ds:
        return int(T_ds)
    return int(max(8, (tt // 8) * 8))       # (8,128) sublane constraint only


def _ensure_min_grid_steps(tT, T_ds, B, min_steps=2):
    """v7x has 2 TCs; with 'parallel' axes the grid is sharded -- keep >=2 steps."""
    steps = B * pl.cdiv(T_ds, tT)
    while steps < min_steps and tT > 8:
        new_tT = max(8, (((tT + 1) // 2 + 7) // 8) * 8)
        if new_tT >= tT:
            break
        tT = new_tT
        steps = B * pl.cdiv(T_ds, tT)
    return tT


def netvlad_pp_pallas(x, centers, conv_w, conv_b, *, downsample=1, stride=2,
                      upsample=False, upsample_mode="linear",
                      out_dtype=jnp.bfloat16, time_tile=None, eps=1e-12,
                      mxu_dtype=None):
    """x: (B, T, D); centers: (K, D); conv_w: (K, D, 1); conv_b: (K,).

    Returns (B, T_ds, K*D) (or (B, T, K*D) if upsample).  Math is f32 in-kernel;
    out_dtype controls only the stored precision (bf16 halves the dominant HBM
    writeback; pass jnp.float32 for exact reference parity).
    """
    B, T, D = x.shape
    K = centers.shape[0]

    # ---- glue: temporal avg-pool (downsample) in plain JAX ----
    # TODO(synk): fuse the avg-pool into the kernel (block x over
    # tT*stride + downsample rows) to avoid one HBM round-trip of x_ds; the
    # input side is K x smaller than the output, so this is a modest win.
    if downsample > 1:
        T_ds = (T - downsample) // stride + 1
        starts = jnp.arange(T_ds) * stride
        win = starts[:, None] + jnp.arange(downsample)[None, :]    # (T_ds, ds)
        x_ds = jnp.mean(x[:, win, :], axis=2)                      # (B, T_ds, D)
    else:
        T_ds = T
        x_ds = x                                                   # no HBM widening

    w = conv_w.reshape(K, D).T.astype(jnp.float32)   # (D, K) pre-transposed
    b = conv_b.reshape(1, K).astype(jnp.float32)     # (1, K)
    c = centers.astype(jnp.float32)                  # (K, D)

    # ---- generation-aware tile / VMEM sizing ----
    cap = _vmem_capacity_bytes()
    out_itemsize = jnp.dtype(out_dtype).itemsize
    x_itemsize = jnp.dtype(x_ds.dtype).itemsize
    if time_tile is None:
        time_tile = _choose_time_tile(T_ds, K, D, x_itemsize=x_itemsize,
                                      out_itemsize=out_itemsize, cap_bytes=cap)
    tT = _ensure_min_grid_steps(int(time_tile), T_ds, B)

    out = pl.pallas_call(
        functools.partial(_netvlad_kernel, eps=eps, mxu_dtype=mxu_dtype),
        out_shape=jax.ShapeDtypeStruct((B, T_ds, K, D), out_dtype),
        grid_spec=pltpu.PrefetchScalarGridSpec(
            num_scalar_prefetch=0,
            grid=(B, pl.cdiv(T_ds, tT)),
            in_specs=[
                pl.BlockSpec((None, tT, D), lambda bi, ti: (bi, ti, 0)),
                pl.BlockSpec((D, K), lambda bi, ti: (0, 0)),     # resident
                pl.BlockSpec((1, K), lambda bi, ti: (0, 0)),     # resident
                pl.BlockSpec((K, D), lambda bi, ti: (0, 0)),     # resident
            ],
            out_specs=pl.BlockSpec((None, tT, K, D),
                                   lambda bi, ti: (bi, ti, 0, 0)),
        ),
        compiler_params=pltpu.CompilerParams(
            dimension_semantics=("parallel", "parallel"),
            vmem_limit_bytes=int(cap)),
    )(x_ds, w, b, c)

    # free metadata reshape: (B, T_ds, K, D) -> (B, T_ds, K*D)
    out = out.reshape(B, T_ds, K * D)

    # ---- glue: temporal upsample back to T (interpolate) in plain JAX ----
    if upsample and T_ds != T:
        if upsample_mode == "nearest":
            idx = jnp.floor(jnp.arange(T) * (T_ds / T)).astype(jnp.int32)
            out = out[:, idx, :]
        else:  # 'linear', align_corners=False
            scale = T_ds / T
            coord = jnp.clip((jnp.arange(T, dtype=jnp.float32) + 0.5) * scale - 0.5,
                             0.0, T_ds - 1)
            lo = jnp.floor(coord).astype(jnp.int32)
            hi = jnp.minimum(lo + 1, T_ds - 1)
            frac = (coord - lo.astype(jnp.float32))[None, :, None]
            out = (out[:, lo, :].astype(jnp.float32) * (1.0 - frac)
                   + out[:, hi, :].astype(jnp.float32) * frac).astype(out.dtype)
    return out


def _reference(x, centers, conv_w, conv_b, *, downsample=1, stride=2, eps=1e-12):
    """Pure-JAX mirror of the PyTorch forward (no upsample) for validation."""
    B, T, D = x.shape
    K = centers.shape[0]
    if downsample > 1:
        T_ds = (T - downsample) // stride + 1
        starts = jnp.arange(T_ds) * stride
        win = starts[:, None] + jnp.arange(downsample)[None, :]
        x_ds = jnp.mean(x[:, win, :], axis=2)
    else:
        T_ds = T
        x_ds = x
    w = conv_w.reshape(K, D)
    logits = jnp.einsum("btd,kd->btk", x_ds, w) + conv_b[None, None, :]
    assn = jax.nn.softmax(logits, axis=-1)                         # over K
    resid = x_ds[:, :, None, :] - centers[None, None, :, :]        # (B,T,K,D)
    weighted = resid * assn[..., None]
    nrm = jnp.sqrt(jnp.sum(weighted * weighted, axis=-1, keepdims=True))
    v = weighted / jnp.maximum(nrm, eps)
    v = v.reshape(B, T_ds, K * D)
    nrm2 = jnp.sqrt(jnp.sum(v * v, axis=-1, keepdims=True))
    return v / jnp.maximum(nrm2, eps)


if __name__ == "__main__":
    key = jax.random.PRNGKey(0)
    k1, k2, k3, k4 = jax.random.split(key, 4)

    # Primary (lane-aligned) config.
    B, T, D, K = 2, 16, 128, 8
    x = jax.random.normal(k1, (B, T, D), dtype=jnp.float32)
    centers = jax.random.normal(k2, (K, D), dtype=jnp.float32)
    conv_w = jax.random.normal(k3, (K, D, 1), dtype=jnp.float32) / jnp.sqrt(D)
    conv_b = jax.random.normal(k4, (K,), dtype=jnp.float32) * 0.01

    # 1) Default path: bf16 output (halves HBM writeback), lane-dense D=128.
    out_bf16 = jax.block_until_ready(netvlad_pp_pallas(x, centers, conv_w, conv_b))
    assert out_bf16.shape == (B, T, K * D)
    assert out_bf16.dtype == jnp.bfloat16
    ref = _reference(x, centers, conv_w, conv_b)
    err = float(jnp.max(jnp.abs(out_bf16.astype(jnp.float32) - ref)))
    assert err < 2e-2, f"bf16 max abs err vs reference: {err}"

    # 2) f32 output + non-lane-aligned D (exercises the masked-store path).
    D2 = 32
    x2 = jax.random.normal(k1, (B, T, D2), dtype=jnp.float32)
    centers2 = jax.random.normal(k2, (K, D2), dtype=jnp.float32)
    conv_w2 = jax.random.normal(k3, (K, D2, 1), dtype=jnp.float32) / jnp.sqrt(D2)
    out_f32 = jax.block_until_ready(
        netvlad_pp_pallas(x2, centers2, conv_w2, conv_b, out_dtype=jnp.float32))
    assert out_f32.shape == (B, T, K * D2) and out_f32.dtype == jnp.float32
    ref2 = _reference(x2, centers2, conv_w2, conv_b)
    err2 = float(jnp.max(jnp.abs(out_f32 - ref2)))
    assert err2 < 5e-3, f"f32 max abs err vs reference: {err2}"

    # 3) Downsample + linear-upsample glue path (default bf16).
    out_up = jax.block_until_ready(
        netvlad_pp_pallas(x, centers, conv_w, conv_b,
                          downsample=2, stride=2, upsample=True,
                          upsample_mode="linear"))
    assert out_up.shape == (B, T, K * D)
    assert bool(jnp.all(jnp.isfinite(out_up.astype(jnp.float32))))

    print("KERNEL_OK")
</pallas_src>

<mosaic_0001>
module attributes {stable_mosaic.version = 11 : i64} {
  func.func @_netvlad_kernel(%arg0: i32, %arg1: i32, %arg2: memref<1x16x128xf32, #tpu.memory_space<vmem>>, %arg3: memref<128x8xf32, #tpu.memory_space<vmem>>, %arg4: memref<1x8xf32, #tpu.memory_space<vmem>>, %arg5: memref<8x128xf32, #tpu.memory_space<vmem>>, %arg6: memref<1x16x8x128xbf16, #tpu.memory_space<vmem>>) attributes {dimension_semantics = [#tpu.dimension_semantics<parallel>, #tpu.dimension_semantics<parallel>], iteration_bounds = array<i64: 2, 1>, scalar_prefetch = 0 : i64, scratch_operands = 0 : i64, tpu.core_type = #tpu.core_type<tc>, window_params = [{transform_indices = @transform_0, window_bounds = array<i64: 1, 16, 128>}, {pipeline_mode = #tpu.pipeline_mode<synchronous>, transform_indices = @transform_1, window_bounds = array<i64: 128, 8>}, {pipeline_mode = #tpu.pipeline_mode<synchronous>, transform_indices = @transform_2, window_bounds = array<i64: 1, 8>}, {pipeline_mode = #tpu.pipeline_mode<synchronous>, transform_indices = @transform_3, window_bounds = array<i64: 8, 128>}, {transform_indices = @transform_4, window_bounds = array<i64: 1, 16, 8, 128>}]} {
    %c0 = arith.constant 0 : index
    %c0_0 = arith.constant 0 : index
    %c0_1 = arith.constant 0 : index
    %0 = vector.load %arg2[%c0, %c0_0, %c0_1] : memref<1x16x128xf32, #tpu.memory_space<vmem>>, vector<1x16x128xf32>
    %1 = vector.shape_cast %0 : vector<1x16x128xf32> to vector<16x128xf32>
    %c0_2 = arith.constant 0 : index
    %c0_3 = arith.constant 0 : index
    %2 = vector.load %arg3[%c0_2, %c0_3] : memref<128x8xf32, #tpu.memory_space<vmem>>, vector<128x8xf32>
    %c0_4 = arith.constant 0 : index
    %c0_5 = arith.constant 0 : index
    %3 = vector.load %arg4[%c0_4, %c0_5] : memref<1x8xf32, #tpu.memory_space<vmem>>, vector<1x8xf32>
    %c0_6 = arith.constant 0 : index
    %c0_7 = arith.constant 0 : index
    %4 = vector.load %arg5[%c0_6, %c0_7] : memref<8x128xf32, #tpu.memory_space<vmem>>, vector<8x128xf32>
    %cst = arith.constant dense<0.000000e+00> : vector<16x8xf32>
    %5 = tpu.matmul %1, %2, %cst {dimension_numbers = #tpu.dot_dimension_numbers<[1], [0], [0], [1], [0, 0, 1, 1], [], []>} : vector<16x128xf32>, vector<128x8xf32>, vector<16x8xf32> -> vector<16x8xf32>
    %6 = vector.broadcast %3 : vector<1x8xf32> to vector<16x8xf32>
    %7 = arith.addf %5, %6 : vector<16x8xf32>
    %cst_8 = arith.constant dense<0xFF800000> : vector<16xf32>
    %8 = vector.multi_reduction <maximumf>, %7, %cst_8 [1] : vector<16x8xf32> to vector<16xf32>
    %9 = vector.shape_cast %8 : vector<16xf32> to vector<16x1xf32>
    %10 = vector.broadcast %9 : vector<16x1xf32> to vector<16x8xf32>
    %11 = arith.subf %7, %10 : vector<16x8xf32>
    %12 = math.exp %11 : vector<16x8xf32>
    %cst_9 = arith.constant dense<0.000000e+00> : vector<16xf32>
    %13 = vector.multi_reduction <add>, %12, %cst_9 [1] : vector<16x8xf32> to vector<16xf32>
    %14 = vector.shape_cast %13 : vector<16xf32> to vector<16x1xf32>
    %15 = tpu.reciprocal %14 {approx = true} : vector<16x1xf32> -> vector<16x1xf32>
    %16 = vector.broadcast %15 : vector<16x1xf32> to vector<16x8xf32>
    %17 = arith.mulf %12, %16 : vector<16x8xf32>
    %18 = vector.shape_cast %1 : vector<16x128xf32> to vector<16x1x128xf32>
    %19 = vector.shape_cast %4 : vector<8x128xf32> to vector<1x8x128xf32>
    %20 = vector.broadcast %18 : vector<16x1x128xf32> to vector<16x8x128xf32>
    %21 = vector.broadcast %19 : vector<1x8x128xf32> to vector<16x8x128xf32>
    %22 = arith.subf %20, %21 : vector<16x8x128xf32>
    %23 = arith.mulf %22, %22 : vector<16x8x128xf32>
    %cst_10 = arith.constant dense<0.000000e+00> : vector<16x8xf32>
    %24 = vector.multi_reduction <add>, %23, %cst_10 [2] : vector<16x8x128xf32> to vector<16x8xf32>
    %25 = math.sqrt %24 : vector<16x8xf32>
    %26 = arith.mulf %17, %25 : vector<16x8xf32>
    %cst_11 = arith.constant 9.99999996E-13 : f32
    %27 = vector.broadcast %cst_11 : f32 to vector<16x8xf32>
    %28 = arith.cmpf ogt, %26, %27 : vector<16x8xf32>
    %cst_12 = arith.constant 1.000000e-36 : f32
    %29 = vector.broadcast %cst_12 : f32 to vector<16x8xf32>
    %30 = arith.maximumf %24, %29 : vector<16x8xf32>
    %31 = math.rsqrt %30 : vector<16x8xf32>
    %cst_13 = arith.constant 9.99999995E+11 : f32
    %32 = vector.broadcast %cst_13 : f32 to vector<16x8xf32>
    %33 = arith.mulf %17, %32 : vector<16x8xf32>
    %34 = arith.select %28, %31, %33 : vector<16x8xi1>, vector<16x8xf32>
    %35 = arith.mulf %24, %34 : vector<16x8xf32>
    %36 = arith.mulf %35, %34 : vector<16x8xf32>
    %cst_14 = arith.constant dense<0.000000e+00> : vector<16xf32>
    %37 = vector.multi_reduction <add>, %36, %cst_14 [1] : vector<16x8xf32> to vector<16xf32>
    %38 = vector.shape_cast %37 : vector<16xf32> to vector<16x1xf32>
    %cst_15 = arith.constant 1.000000e-24 : f32
    %39 = vector.broadcast %cst_15 : f32 to vector<16x1xf32>
    %40 = arith.maximumf %38, %39 : vector<16x1xf32>
    %41 = math.rsqrt %40 : vector<16x1xf32>
    %42 = vector.broadcast %41 : vector<16x1xf32> to vector<16x8xf32>
    %43 = arith.mulf %34, %42 : vector<16x8xf32>
    %44 = vector.shape_cast %43 : vector<16x8xf32> to vector<16x8x1xf32>
    %45 = vector.broadcast %44 : vector<16x8x1xf32> to vector<16x8x128xf32>
    %46 = arith.mulf %22, %45 : vector<16x8x128xf32>
    %47 = arith.truncf %46 : vector<16x8x128xf32> to vector<16x8x128xbf16>
    %c0_16 = arith.constant 0 : index
    %c0_17 = arith.constant 0 : index
    %c0_18 = arith.constant 0 : index
    %c0_19 = arith.constant 0 : index
    %48 = vector.load %arg6[%c0_16, %c0_17, %c0_18, %c0_19] : memref<1x16x8x128xbf16, #tpu.memory_space<vmem>>, vector<1x16x8x128xbf16>
    %49 = vector.shape_cast %48 : vector<1x16x8x128xbf16> to vector<16x8x128xbf16>
    %50 = vector.shape_cast %47 : vector<16x8x128xbf16> to vector<1x16x8x128xbf16>
    tpu.vector_store %arg6[%c0_16, %c0_17, %c0_18, %c0_19], %50 {strides = array<i32>} : memref<1x16x8x128xbf16, #tpu.memory_space<vmem>>, vector<1x16x8x128xbf16>,
    return
  }
  func.func @transform_0(%arg0: i32, %arg1: i32) -> (i32, i32, i32) {
    %c0_i32 = arith.constant 0 : i32
    %c0_i32_0 = arith.constant 0 : i32
    return %arg0, %arg1, %c0_i32 : i32, i32, i32
  }
  func.func @transform_1(%arg0: i32, %arg1: i32) -> (i32, i32) {
    %c0_i32 = arith.constant 0 : i32
    %c0_i32_0 = arith.constant 0 : i32
    %c0_i32_1 = arith.constant 0 : i32
    return %c0_i32, %c0_i32_0 : i32, i32
  }
  func.func @transform_2(%arg0: i32, %arg1: i32) -> (i32, i32) {
    %c0_i32 = arith.constant 0 : i32
    %c0_i32_0 = arith.constant 0 : i32
    %c0_i32_1 = arith.constant 0 : i32
    return %c0_i32, %c0_i32_0 : i32, i32
  }
  func.func @transform_3(%arg0: i32, %arg1: i32) -> (i32, i32) {
    %c0_i32 = arith.constant 0 : i32
    %c0_i32_0 = arith.constant 0 : i32
    %c0_i32_1 = arith.constant 0 : i32
    return %c0_i32, %c0_i32_0 : i32, i32
  }
  func.func @transform_4(%arg0: i32, %arg1: i32) -> (i32, i32, i32, i32) {
    %c0_i32 = arith.constant 0 : i32
    %c0_i32_0 = arith.constant 0 : i32
    %c0_i32_1 = arith.constant 0 : i32
    return %arg0, %arg1, %c0_i32, %c0_i32_0 : i32, i32, i32, i32
  }
}

</mosaic_0001>

<llo_original>
// kernel: tpu_custom_call.1
$region0: #{tpu_custom_call.1}
  #allocation0 [shape = 'u32[]', space=smem, size = 0x4, offset = 0x4, fixed_abs, tag = 'smem constant byte address 0x4 - core index']
  #allocation1 [shape = 'u32[144,128]{1,0:T(1,128)}', space=vmem, size = 0x12000, scoped, tag = 'internal scratch']
  %s0 = inlined_call_operand.vmem [shape: f32[2,16,128], index: 0, kind: input, shape index: {}]
  %s1 = inlined_call_operand.vmem [shape: f32[128,8], index: 1, kind: input, shape index: {}]
  %s2 = inlined_call_operand.vmem [shape: f32[1,8], index: 2, kind: input, shape index: {}]
  %s3 = inlined_call_operand.vmem [shape: f32[8,128], index: 3, kind: input, shape index: {}]
  %s4 = inlined_call_operand.hbm [shape: bf16[2,16,8,128], index: 4, kind: output, shape index: {}]
  %s5 = sld [smem:[#allocation0]]
  $region49: #{tpu_custom_call.1} parent=0
    _
  %s7 = ssub.s32 1, %s5
  %s8 = scalar_select 0, %s7, %s5
  $region1: #{tpu_custom_call.1} parent=0
    #allocation2 [shape = 'u8[65536]{0}', space=vmem, size = 0x10000, scoped, tag = 'output window, operand 0']
    #allocation3 [shape = 's32[2]{0}', space=sflag, size = 0x8, scoped, tag = 'scoped memory for tpu_custom_call.1']
    %9 = vsyncpa [#allocation3], 0
    %s10 = scalar_lea.sflag [#allocation3], 1
    %11 = vsyncpa %s10, 0
    loop: start=0, step=1, limit=4
    $region2: #{tpu_custom_call.1} parent=1 // loop_pre_header
      _
    $region3: #{tpu_custom_call.1} parent=1 // loop_header
      %s13 = sphi 0, %s17
      %p14 = scmp.ge.s32.totalorder %s13, 4
      %s20 = sphi 0, %s32
      %s21 = sphi 0, %s28
      %s22 = sphi 0, %s20
      %s23 = sphi 0, %s21
      %s24 = sphi 0, %s22
      %s25 = sphi 0, %s23
      %s37 = sphi 0, %s39
      %s40 = sphi 0, %s37
      %s41 = sphi 0, %s40
      %s57 = sphi 0, %s41
      %s61 = sphi 0, %s61
      %s63 = sphi 0, %s61
      %s64 = sphi 0, %s63
      %s78 = sphi 0, %s64
      %s82 = sphi 0, %s82
      %s84 = sphi 0, %s82
      %s85 = sphi 0, %s84
      %s99 = sphi 0, %s85
      %s103 = sphi 0, %s103
      %s105 = sphi 0, %s103
      %s106 = sphi 0, %s105
      %s120 = sphi 0, %s106
      %s128 = sphi 0, %s130
      %s131 = sphi 0, %s128
      %s132 = sphi 0, %s131
      %s148 = sphi 0, %s132
    $region4: #{tpu_custom_call.1} parent=1 // loop_header_branch
      %16 = sbr.rel (%p14) target = $region8
    $region5: #{tpu_custom_call.1} parent=1 // loop_body
      %s18 = ssub.s32 %s13, 1
      %s19 = ssub.s32 %s13, 2
      %s26 = sadd.s32 1, %s21
      %p27 = scmp.ge.s32.totalorder %s26, 1
      %s28 = scalar_select %p27, 0, %s26
      %s29 = sadd.s32 1, %s20
      %s30 = scalar_select %p27, %s29, %s20
      %p31 = scmp.ge.s32.totalorder %s30, 2
      %s32 = scalar_select %p31, 0, %s30
      %s33 = ssub.s32 %s20, %s32
      %s34 = ssub.s32 %s21, %s28
      %s35 = sor.u32 %s33, %s34
      %p36 = scmp.eq.s32.totalorder %s35, 0
      %s38 = sadd.s32 %s37, 1
      %s39 = scalar_select %p36, %s37, %s38
      %p42 = pneg %p36
      %p43 = scmp.eq.s32.totalorder %s13, 1
      %p44 = por %p42, %p43
      %p45 = scmp.ne.s32.totalorder %s37, %s40
      %p46 = scmp.eq.s32.totalorder %s13, 0
      %p47 = por %p45, %p46
      %p48 = scmp.ne.s32.totalorder %s37, %s40
      %p49 = scmp.eq.s32.totalorder %s18, 1
      %p50 = por %p48, %p49
      %p51 = scmp.ne.s32.totalorder %s40, %s41
      %p52 = scmp.eq.s32.totalorder %s18, 0
      %p53 = por %p51, %p52
      %p54 = scmp.ne.s32.totalorder %s40, %s41
      %p55 = scmp.eq.s32.totalorder %s19, 1
      %p56 = por %p54, %p55
      %p58 = scmp.ne.s32.totalorder %s41, %s57
      %p59 = scmp.eq.s32.totalorder %s19, 0
      %p60 = por %p58, %p59
      %s62 = sadd.s32 %s61, 1
      %p65 = scmp.eq.s32.totalorder %s13, 1
      %p66 = scmp.ne.s32.totalorder %s61, %s63
      %p67 = scmp.eq.s32.totalorder %s13, 0
      %p68 = por %p66, %p67
      %p69 = scmp.ne.s32.totalorder %s61, %s63
      %p70 = scmp.eq.s32.totalorder %s18, 1
      %p71 = por %p69, %p70
      %p72 = scmp.ne.s32.totalorder %s63, %s64
      %p73 = scmp.eq.s32.totalorder %s18, 0
      %p74 = por %p72, %p73
      %p75 = scmp.ne.s32.totalorder %s63, %s64
      %p76 = scmp.eq.s32.totalorder %s19, 1
      %p77 = por %p75, %p76
      %p79 = scmp.ne.s32.totalorder %s64, %s78
      %p80 = scmp.eq.s32.totalorder %s19, 0
      %p81 = por %p79, %p80
      %s83 = sadd.s32 %s82, 1
      %p86 = scmp.eq.s32.totalorder %s13, 1
      %p87 = scmp.ne.s32.totalorder %s82, %s84
      %p88 = scmp.eq.s32.totalorder %s13, 0
      %p89 = por %p87, %p88
      %p90 = scmp.ne.s32.totalorder %s82, %s84
      %p91 = scmp.eq.s32.totalorder %s18, 1
      %p92 = por %p90, %p91
      %p93 = scmp.ne.s32.totalorder %s84, %s85
      %p94 = scmp.eq.s32.totalorder %s18, 0
      %p95 = por %p93, %p94
      %p96 = scmp.ne.s32.totalorder %s84, %s85
      %p97 = scmp.eq.s32.totalorder %s19, 1
      %p98 = por %p96, %p97
      %p100 = scmp.ne.s32.totalorder %s85, %s99
      %p101 = scmp.eq.s32.totalorder %s19, 0
      %p102 = por %p100, %p101
      %s104 = sadd.s32 %s103, 1
      %p107 = scmp.eq.s32.totalorder %s13, 1
      %p108 = scmp.ne.s32.totalorder %s103, %s105
      %p109 = scmp.eq.s32.totalorder %s13, 0
      %p110 = por %p108, %p109
      %p111 = scmp.ne.s32.totalorder %s103, %s105
      %p112 = scmp.eq.s32.totalorder %s18, 1
      %p113 = por %p111, %p112
      %p114 = scmp.ne.s32.totalorder %s105, %s106
      %p115 = scmp.eq.s32.totalorder %s18, 0
      %p116 = por %p114, %p115
      %p117 = scmp.ne.s32.totalorder %s105, %s106
      %p118 = scmp.eq.s32.totalorder %s19, 1
      %p119 = por %p117, %p118
      %p121 = scmp.ne.s32.totalorder %s106, %s120
      %p122 = scmp.eq.s32.totalorder %s19, 0
      %p123 = por %p121, %p122
      %s124 = ssub.s32 %s20, %s32
      %s125 = ssub.s32 %s21, %s28
      %s126 = sor.u32 %s124, %s125
      %p127 = scmp.eq.s32.totalorder %s126, 0
      %s129 = sadd.s32 %s128, 1
      %s130 = scalar_select %p127, %s128, %s129
      %p133 = pneg %p127
      %p134 = scmp.eq.s32.totalorder %s13, 1
      %p135 = por %p133, %p134
      %p136 = scmp.ne.s32.totalorder %s128, %s131
      %p137 = scmp.eq.s32.totalorder %s13, 0
      %p138 = por %p136, %p137
      %p139 = scmp.ne.s32.totalorder %s128, %s131
      %p140 = scmp.eq.s32.totalorder %s18, 1
      %p141 = por %p139, %p140
      %p142 = scmp.ne.s32.totalorder %s131, %s132
      %p143 = scmp.eq.s32.totalorder %s18, 0
      %p144 = por %p142, %p143
      %p145 = scmp.ne.s32.totalorder %s131, %s132
      %p146 = scmp.eq.s32.totalorder %s19, 1
      %p147 = por %p145, %p146
      %p149 = scmp.ne.s32.totalorder %s132, %s148
      %p150 = scmp.eq.s32.totalorder %s19, 0
      %p151 = por %p149, %p150
      %p152 = scmp.le.s32.totalorder 1, %s13
      %p153 = scmp.lt.s32.totalorder %s13, 3
      %p154 = pnand %p152, %p153
      %p155 = pneg %p154
      // Predicated region
      $region9: #{tpu_custom_call.1} parent=5 // pred_check
        _
      $region10: #{tpu_custom_call.1} parent=5 // pred_check_branch
        %157 = sbr.rel (%p154) target = $region12
      $region11: #{tpu_custom_call.1} parent=5 // pred_region
        %s158 = ssub.s32 %s13, 1
        // Predicated region
        $region13: #{tpu_custom_call.1} parent=11 // pred_check
          %p159 = pneg %p74
        $region14: #{tpu_custom_call.1} parent=11 // pred_check_branch
          %161 = sbr.rel (%p159) target = $region16
        $region15: #{tpu_custom_call.1} parent=11 // pred_region
          _
        $region16: #{tpu_custom_call.1} parent=11 // pred_fallthru
          _
        // Predicated region
        $region17: #{tpu_custom_call.1} parent=11 // pred_check
          %p162 = pneg %p95
        $region18: #{tpu_custom_call.1} parent=11 // pred_check_branch
          %164 = sbr.rel (%p162) target = $region20
        $region19: #{tpu_custom_call.1} parent=11 // pred_region
          _
        $region20: #{tpu_custom_call.1} parent=11 // pred_fallthru
          _
        // Predicated region
        $region21: #{tpu_custom_call.1} parent=11 // pred_check
          %p165 = pneg %p116
        $region22: #{tpu_custom_call.1} parent=11 // pred_check_branch
          %167 = sbr.rel (%p165) target = $region24
        $region23: #{tpu_custom_call.1} parent=11 // pred_region
          _
        $region24: #{tpu_custom_call.1} parent=11 // pred_fallthru
          _
      $region12: #{tpu_custom_call.1} parent=5 // pred_fallthru
        _
      %p168 = scmp.lt.s32.totalorder %s13, 2
      // Predicated region
      $region25: #{tpu_custom_call.1} parent=5 // pred_check
        %p169 = pneg %p168
      $region26: #{tpu_custom_call.1} parent=5 // pred_check_branch
        %171 = sbr.rel (%p169) target = $region28
      $region27: #{tpu_custom_call.1} parent=5 // pred_region
        // Predicated region
        $region29: #{tpu_custom_call.1} parent=27 // pred_check
          %p172 = pneg %p47
        $region30: #{tpu_custom_call.1} parent=27 // pred_check_branch
          %174 = sbr.rel (%p172) target = $region32
        $region31: #{tpu_custom_call.1} parent=27 // pred_region
          %s175 = smul.u32 2, %s21
          %p176 = scmp.lt.s32.totalorder %s20, 1
          %s177 = scalar_select %p176, %s20, 1
          %p178 = scmp.lt.s32.totalorder %s175, 1
          %s179 = scalar_select %p178, %s175, 1
          %s180 = smul.addr %s177, 2
          %s181 = sadd.s32 %s179, %s180
          %s182 = smul.addr %s181, 8
          %s183 = scalar_lea.vmem %s0, %s182
          %s184 = smul.u32 2, %s21
        $region32: #{tpu_custom_call.1} parent=27 // pred_fallthru
          _
      $region28: #{tpu_custom_call.1} parent=5 // pred_fallthru
        _
      %p185 = scmp.le.s32.totalorder 1, %s13
      %p186 = scmp.lt.s32.totalorder %s13, 3
      %p187 = pnand %p185, %p186
      %p188 = pneg %p187
      // Predicated region
      $region33: #{tpu_custom_call.1} parent=5 // pred_check
        _
      $region34: #{tpu_custom_call.1} parent=5 // pred_check_branch
        %190 = sbr.rel (%p187) target = $region36
      $region35: #{tpu_custom_call.1} parent=5 // pred_region
        %s191 = ssub.s32 %s13, 1
        %s192 = smul.u32 2, %s23
        %p193 = scmp.lt.s32.totalorder %s22, 1
        %s194 = scalar_select %p193, %s22, 1
        %p195 = scmp.lt.s32.totalorder %s192, 1
        %s196 = scalar_select %p195, %s192, 1
        %s197 = smul.addr %s194, 2
        %s198 = sadd.s32 %s196, %s197
        %s199 = smul.addr %s198, 8
        %s200 = scalar_lea.vmem %s0, %s199
        %p201 = pneg %p53
        %p202 = pneg %p50
        %p203 = pneg %p74
        %p204 = pneg %p71
        %p205 = pneg %p95
        %p206 = pneg %p92
        %p207 = pneg %p116
        %p208 = pneg %p113
        %p209 = pneg %p144
        %p210 = pneg %p141
        %s211 = sand.u32 %s131, 1
        %s212 = scalar_lea.sflag [#allocation3], %s211
        %s213 = sand.u32 %s131, 1
        %s214 = smul.addr %s213, 64
        %s215 = scalar_lea.vmem [#allocation2], %s214
        %s216 = smul.u32 2, %s23
        %p217 = scmp.lt.s32.totalorder %s22, 1
        %s218 = scalar_select %p217, %s22, 1
        %p219 = scmp.lt.s32.totalorder %s216, 1
        %s220 = scalar_select %p219, %s216, 1
        %s221 = smul.addr %s218, 2
        %s222 = sadd.s32 %s220, %s221
        %s223 = smul.addr %s222, 8
        %s224 = scalar_lea.vmem %s0, %s223
        %s225 = smul.u32 2, %s23
        %s226 = smul.u32 16, %s23
        %v227 = vld [vmem:[%s224] sm:$0xff]
        %v228 = vld [vmem:[%s224 + $0x8] sm:$0xff]
        %v229 = vld [vmem:[%s1] sm:$0xff]
        %v230 = vld [vmem:[%s1 + $0x8] sm:$0xff]
        %v231 = vld [vmem:[%s1 + $0x10] sm:$0xff]
        %v232 = vld [vmem:[%s1 + $0x18] sm:$0xff]
        %v233 = vld [vmem:[%s1 + $0x20] sm:$0xff]
        %v234 = vld [vmem:[%s1 + $0x28] sm:$0xff]
        %v235 = vld [vmem:[%s1 + $0x30] sm:$0xff]
        %v236 = vld [vmem:[%s1 + $0x38] sm:$0xff]
        %v237 = vld [vmem:[%s1 + $0x40] sm:$0xff]
        %v238 = vld [vmem:[%s1 + $0x48] sm:$0xff]
        %v239 = vld [vmem:[%s1 + $0x50] sm:$0xff]
        %v240 = vld [vmem:[%s1 + $0x58] sm:$0xff]
        %v241 = vld [vmem:[%s1 + $0x60] sm:$0xff]
        %v242 = vld [vmem:[%s1 + $0x68] sm:$0xff]
        %v243 = vld [vmem:[%s1 + $0x70] sm:$0xff]
        %v244 = vld [vmem:[%s1 + $0x78] sm:$0xff]
        %v245 = vld [vmem:[%s2] sm:$0x1]
        %v246 = vld [vmem:[%s3] sm:$0xff]
        %v248 = vlaneseq
        %v249 = vshrl.u32 %v248, 7
        %v250 = vsub.s32 0, %v249
        %v251 = vrot.slane %v245, %v250
        %253 = vmatprep.subr.mxu0 0.0
        %254 = vmatpush1.msra.mxu0 %v244
        %255 = vmatprep.subr.mxu0 0.0
        %256 = vmatpush1.msra.mxu0 %v243
        %257 = vmatprep.subr.mxu0 0.0
        %258 = vmatpush1.msra.mxu0 %v242
        %259 = vmatprep.subr.mxu0 0.0
        %260 = vmatpush1.msra.mxu0 %v241
        %261 = vmatprep.subr.mxu0 0.0
        %262 = vmatpush1.msra.mxu0 %v240
        %263 = vmatprep.subr.mxu0 0.0
        %264 = vmatpush1.msra.mxu0 %v239
        %265 = vmatprep.subr.mxu0 0.0
        %266 = vmatpush1.msra.mxu0 %v238
        %267 = vmatprep.subr.mxu0 0.0
        %268 = vmatpush1.msra.mxu0 %v237
        %269 = vmatprep.subr.mxu0 0.0
        %270 = vmatpush1.msra.mxu0 %v236
        %271 = vmatprep.subr.mxu0 0.0
        %272 = vmatpush1.msra.mxu0 %v235
        %273 = vmatprep.subr.mxu0 0.0
        %274 = vmatpush1.msra.mxu0 %v234
        %275 = vmatprep.subr.mxu0 0.0
        %276 = vmatpush1.msra.mxu0 %v233
        %277 = vmatprep.subr.mxu0 0.0
        %278 = vmatpush1.msra.mxu0 %v232
        %279 = vmatprep.subr.mxu0 0.0
        %280 = vmatpush1.msra.mxu0 %v231
        %281 = vmatprep.subr.mxu0 0.0
        %282 = vmatpush1.msra.mxu0 %v230
        %283 = vmatprep.subr.mxu0 0.0
        %284 = vmatpush1.msra.mxu0 %v229
        %285 = vmatprep.subr.mxu0 0.0
        %286 = vmatpush2.msra.mxu0 0.0
        %287 = vmatprep.subr.mxu0 0.0
        %288 = vmatpush2.msra.mxu0 0.0
        %289 = vmatprep.subr.mxu0 0.0
        %290 = vmatpush2.msra.mxu0 0.0
        %291 = vmatprep.subr.mxu0 0.0
        %292 = vmatpush2.msra.mxu0 0.0
        %293 = vmatprep.subr.mxu0 0.0
        %294 = vmatpush2.msra.mxu0 0.0
        %295 = vmatprep.subr.mxu0 0.0
        %296 = vmatpush2.msra.mxu0 0.0
        %297 = vmatprep.subr.mxu0 0.0
        %298 = vmatpush2.msra.mxu0 0.0
        %299 = vmatprep.subr.mxu0 0.0
        %300 = vmatpush2.msra.mxu0 0.0
        %301 = vmatprep.subr.mxu0 0.0
        %302 = vmatpush2.msra.mxu0 0.0
        %303 = vmatprep.subr.mxu0 0.0
        %304 = vmatpush2.msra.mxu0 0.0
        %305 = vmatprep.subr.mxu0 0.0
        %306 = vmatpush2.msra.mxu0 0.0
        %307 = vmatprep.subr.mxu0 0.0
        %308 = vmatpush2.msra.mxu0 0.0
        %309 = vmatprep.subr.mxu0 0.0
        %310 = vmatpush2.msra.mxu0 0.0
        %311 = vmatprep.subr.mxu0 0.0
        %312 = vmatpush2.msra.mxu0 0.0
        %313 = vmatprep.subr.mxu0 0.0
        %314 = vmatpush2.msra.mxu0 0.0
        %315 = vmatprep.subr.mxu0 0.0
        %316 = vmatpush2.msra.mxu0 0.0
        %317 = vmatprep.mubr.f32.mxu0 0.0
        %318 = vmatmul.mubr.f32.gmra.mxu0 %v227
        %v319 = vpop.f32.mrf.mxu0
        %v320 = vadd.f32 %v251, %v319
        %v321 = vpop.f32.mrf.mxu0
        %322 = vmatprep.mubr.f32.mxu0 0.0
        %323 = vmatmul.mubr.f32.gmra.mxu0 %v228
        %v324 = vpop.f32.mrf.mxu0
        %v325 = vadd.f32 %v251, %v324
        %v326 = vpop.f32.mrf.mxu0
        %327 = vdwg.mxu0
        %vm328 = vcmask 64512
        %v329 = vsel %vm328, %v320, -inf
        %330 = vmax.xlane.f32.xlu0 %v329
        %v331 = vpop.xlane.xlu0 %330
        %v332 = vsel %vm328, %v325, -inf
        %333 = vmax.xlane.f32.xlu0 %v332
        %v334 = vpop.xlane.xlu0 %333
        %v335 = vsub.f32 %v320, %v331
        %v336 = vsub.f32 %v325, %v334
        %v337 = vmul.f32 %v335, 1.442695
        %v338 = vpow.pop %v337
        %v339 = vmul.f32 %v336, 1.442695
        %v340 = vpow.pop %v339
        %v341 = vsel %vm328, %v338, 0.0
        %342 = vadd.xlane.f32.xlu0 %v341
        %v343 = vpop.xlane.xlu0 %342
        %v344 = vsel %vm328, %v340, 0.0
        %345 = vadd.xlane.f32.xlu0 %v344
        %v346 = vpop.xlane.xlu0 %345
        %v347 = vrcp.pop %v343
        %v348 = vrcp.pop %v346
        %v349 = vmul.f32 %v338, %v347
        %v350 = vmul.f32 %v340, %v348
        %v353 = vcombine.high %v227, %v227
        %v355 = vunpack.c.l.s4 1966171168
        %v356 = vunpack.c.0.s8 %v355
        %v357 = vlaneseq
        %v358 = vshrl.u32 %v357, 7
        %v359 = vsub.s32 %v356, %v358
        %v360 = vrot.slane %v227, %v359
        %v362 = vunpack.c.l.s4 1966171168
        %v363 = vunpack.c.0.s8 %v362
        %v364 = vlaneseq
        %v365 = vshrl.u32 %v364, 7
        %v366 = vsub.s32 %v363, %v365
        %v367 = vrot.slane %v353, %v366
        %v368 = vcombine.high %v360, %v360
        %v369 = vcombine.high %v367, %v367
        %v371 = vunpack.c.l.s4 1966171168
        %v372 = vunpack.c.0.s8 %v371
        %v373 = vlaneseq
        %v374 = vshrl.u32 %v373, 7
        %v375 = vsub.s32 %v372, %v374
        %v376 = vrot.slane %v360, %v375
        %v378 = vunpack.c.l.s4 1966171168
        %v379 = vunpack.c.0.s8 %v378
        %v380 = vlaneseq
        %v381 = vshrl.u32 %v380, 7
        %v382 = vsub.s32 %v379, %v381
        %v383 = vrot.slane %v367, %v382
        %v385 = vunpack.c.l.s4 1966171168
        %v386 = vunpack.c.0.s8 %v385
        %v387 = vlaneseq
        %v388 = vshrl.u32 %v387, 7
        %v389 = vsub.s32 %v386, %v388
        %v390 = vrot.slane %v368, %v389
        %v392 = vunpack.c.l.s4 1966171168
        %v393 = vunpack.c.0.s8 %v392
        %v394 = vlaneseq
        %v395 = vshrl.u32 %v394, 7
        %v396 = vsub.s32 %v393, %v395
        %v397 = vrot.slane %v369, %v396
        %v398 = vcombine.high %v376, %v376
        %v399 = vcombine.high %v383, %v383
        %v400 = vcombine.high %v390, %v390
        %v401 = vcombine.high %v397, %v397
        %v402 = vcombine.high %v228, %v228
        %v404 = vunpack.c.l.s4 1966171168
        %v405 = vunpack.c.0.s8 %v404
        %v406 = vlaneseq
        %v407 = vshrl.u32 %v406, 7
        %v408 = vsub.s32 %v405, %v407
        %v409 = vrot.slane %v228, %v408
        %v411 = vunpack.c.l.s4 1966171168
        %v412 = vunpack.c.0.s8 %v411
        %v413 = vlaneseq
        %v414 = vshrl.u32 %v413, 7
        %v415 = vsub.s32 %v412, %v414
        %v416 = vrot.slane %v402, %v415
        %v417 = vcombine.high %v409, %v409
        %v418 = vcombine.high %v416, %v416
        %v420 = vunpack.c.l.s4 1966171168
        %v421 = vunpack.c.0.s8 %v420
        %v422 = vlaneseq
        %v423 = vshrl.u32 %v422, 7
        %v424 = vsub.s32 %v421, %v423
        %v425 = vrot.slane %v409, %v424
        %v427 = vunpack.c.l.s4 1966171168
        %v428 = vunpack.c.0.s8 %v427
        %v429 = vlaneseq
        %v430 = vshrl.u32 %v429, 7
        %v431 = vsub.s32 %v428, %v430
        %v432 = vrot.slane %v416, %v431
        %v434 = vunpack.c.l.s4 1966171168
        %v435 = vunpack.c.0.s8 %v434
        %v436 = vlaneseq
        %v437 = vshrl.u32 %v436, 7
        %v438 = vsub.s32 %v435, %v437
        %v439 = vrot.slane %v417, %v438
        %v441 = vunpack.c.l.s4 1966171168
        %v442 = vunpack.c.0.s8 %v441
        %v443 = vlaneseq
        %v444 = vshrl.u32 %v443, 7
        %v445 = vsub.s32 %v442, %v444
        %v446 = vrot.slane %v418, %v445
        %v447 = vcombine.high %v425, %v425
        %v448 = vcombine.high %v432, %v432
        %v449 = vcombine.high %v439, %v439
        %v450 = vcombine.high %v446, %v446
        %v451 = vlaneseq
        %v452 = vshrl.u32 %v451, 7
        %v453 = vsub.s32 0, %v452
        %v454 = vrot.slane %v376, %v453
        %v455 = vlaneseq
        %v456 = vshrl.u32 %v455, 7
        %v457 = vsub.s32 0, %v456
        %v458 = vrot.slane %v390, %v457
        %v459 = vlaneseq
        %v460 = vshrl.u32 %v459, 7
        %v461 = vsub.s32 0, %v460
        %v462 = vrot.slane %v398, %v461
        %v463 = vlaneseq
        %v464 = vshrl.u32 %v463, 7
        %v465 = vsub.s32 0, %v464
        %v466 = vrot.slane %v400, %v465
        %v467 = vlaneseq
        %v468 = vshrl.u32 %v467, 7
        %v469 = vsub.s32 0, %v468
        %v470 = vrot.slane %v383, %v469
        %v471 = vlaneseq
        %v472 = vshrl.u32 %v471, 7
        %v473 = vsub.s32 0, %v472
        %v474 = vrot.slane %v397, %v473
        %v475 = vlaneseq
        %v476 = vshrl.u32 %v475, 7
        %v477 = vsub.s32 0, %v476
        %v478 = vrot.slane %v399, %v477
        %v479 = vlaneseq
        %v480 = vshrl.u32 %v479, 7
        %v481 = vsub.s32 0, %v480
        %v482 = vrot.slane %v401, %v481
        %v483 = vlaneseq
        %v484 = vshrl.u32 %v483, 7
        %v485 = vsub.s32 0, %v484
        %v486 = vrot.slane %v425, %v485
        %v487 = vlaneseq
        %v488 = vshrl.u32 %v487, 7
        %v489 = vsub.s32 0, %v488
        %v490 = vrot.slane %v439, %v489
        %v491 = vlaneseq
        %v492 = vshrl.u32 %v491, 7
        %v493 = vsub.s32 0, %v492
        %v494 = vrot.slane %v447, %v493
        %v495 = vlaneseq
        %v496 = vshrl.u32 %v495, 7
        %v497 = vsub.s32 0, %v496
        %v498 = vrot.slane %v449, %v497
        %v499 = vlaneseq
        %v500 = vshrl.u32 %v499, 7
        %v501 = vsub.s32 0, %v500
        %v502 = vrot.slane %v432, %v501
        %v503 = vlaneseq
        %v504 = vshrl.u32 %v503, 7
        %v505 = vsub.s32 0, %v504
        %v506 = vrot.slane %v446, %v505
        %v507 = vlaneseq
        %v508 = vshrl.u32 %v507, 7
        %v509 = vsub.s32 0, %v508
        %v510 = vrot.slane %v448, %v509
        %v511 = vlaneseq
        %v512 = vshrl.u32 %v511, 7
        %v513 = vsub.s32 0, %v512
        %v514 = vrot.slane %v450, %v513
        %v531 = vsub.f32 %v454, %v246
        %v532 = vsub.f32 %v458, %v246
        %v533 = vsub.f32 %v462, %v246
        %v534 = vsub.f32 %v466, %v246
        %v535 = vsub.f32 %v470, %v246
        %v536 = vsub.f32 %v474, %v246
        %v537 = vsub.f32 %v478, %v246
        %v538 = vsub.f32 %v482, %v246
        %v539 = vsub.f32 %v486, %v246
        %v540 = vsub.f32 %v490, %v246
        %v541 = vsub.f32 %v494, %v246
        %v542 = vsub.f32 %v498, %v246
        %v543 = vsub.f32 %v502, %v246
        %v544 = vsub.f32 %v506, %v246
        %v545 = vsub.f32 %v510, %v246
        %v546 = vsub.f32 %v514, %v246
        %v547 = vmul.f32 %v531, %v531
        %v548 = vmul.f32 %v532, %v532
        %v549 = vmul.f32 %v533, %v533
        %v550 = vmul.f32 %v534, %v534
        %v551 = vmul.f32 %v535, %v535
        %v552 = vmul.f32 %v536, %v536
        %v553 = vmul.f32 %v537, %v537
        %v554 = vmul.f32 %v538, %v538
        %v555 = vmul.f32 %v539, %v539
        %v556 = vmul.f32 %v540, %v540
        %v557 = vmul.f32 %v541, %v541
        %v558 = vmul.f32 %v542, %v542
        %v559 = vmul.f32 %v543, %v543
        %v560 = vmul.f32 %v544, %v544
        %v561 = vmul.f32 %v545, %v545
        %v562 = vmul.f32 %v546, %v546
        %563 = vadd.xlane.f32.xlu0 %v547
        %v564 = vpop.xlane.xlu0 %563
        %565 = vadd.xlane.f32.xlu0 %v548
        %v566 = vpop.xlane.xlu0 %565
        %567 = vadd.xlane.f32.xlu0 %v549
        %v568 = vpop.xlane.xlu0 %567
        %569 = vadd.xlane.f32.xlu0 %v550
        %v570 = vpop.xlane.xlu0 %569
        %571 = vadd.xlane.f32.xlu0 %v551
        %v572 = vpop.xlane.xlu0 %571
        %573 = vadd.xlane.f32.xlu0 %v552
        %v574 = vpop.xlane.xlu0 %573
        %575 = vadd.xlane.f32.xlu0 %v553
        %v576 = vpop.xlane.xlu0 %575
        %577 = vadd.xlane.f32.xlu0 %v554
        %v578 = vpop.xlane.xlu0 %577
        %579 = vadd.xlane.f32.xlu0 %v555
        %v580 = vpop.xlane.xlu0 %579
        %581 = vadd.xlane.f32.xlu0 %v556
        %v582 = vpop.xlane.xlu0 %581
        %583 = vadd.xlane.f32.xlu0 %v557
        %v584 = vpop.xlane.xlu0 %583
        %585 = vadd.xlane.f32.xlu0 %v558
        %v586 = vpop.xlane.xlu0 %585
        %587 = vadd.xlane.f32.xlu0 %v559
        %v588 = vpop.xlane.xlu0 %587
        %589 = vadd.xlane.f32.xlu0 %v560
        %v590 = vpop.xlane.xlu0 %589
        %591 = vadd.xlane.f32.xlu0 %v561
        %v592 = vpop.xlane.xlu0 %591
        %593 = vadd.xlane.f32.xlu0 %v562
        %v594 = vpop.xlane.xlu0 %593
        %v595 = vrsqrt.pop %v564
        %v596 = vmul.f32 %v564, %v595
        %vm597 = vcmp.eq.f32.partialorder %v564, inf
        %v598 = vsel %vm597, %v564, %v596
        %vm599 = vcmp.eq.f32.partialorder %v564, 0.0
        %v600 = vand.u32 %v564, 2147483648
        %v601 = vsel %vm599, %v600, %v598
        %v602 = vrsqrt.pop %v566
        %v603 = vmul.f32 %v566, %v602
        %vm604 = vcmp.eq.f32.partialorder %v566, inf
        %v605 = vsel %vm604, %v566, %v603
        %vm606 = vcmp.eq.f32.partialorder %v566, 0.0
        %v607 = vand.u32 %v566, 2147483648
        %v608 = vsel %vm606, %v607, %v605
        %v609 = vrsqrt.pop %v568
        %v610 = vmul.f32 %v568, %v609
        %vm611 = vcmp.eq.f32.partialorder %v568, inf
        %v612 = vsel %vm611, %v568, %v610
        %vm613 = vcmp.eq.f32.partialorder %v568, 0.0
        %v614 = vand.u32 %v568, 2147483648
        %v615 = vsel %vm613, %v614, %v612
        %v616 = vrsqrt.pop %v570
        %v617 = vmul.f32 %v570, %v616
        %vm618 = vcmp.eq.f32.partialorder %v570, inf
        %v619 = vsel %vm618, %v570, %v617
        %vm620 = vcmp.eq.f32.partialorder %v570, 0.0
        %v621 = vand.u32 %v570, 2147483648
        %v622 = vsel %vm620, %v621, %v619
        %v623 = vrsqrt.pop %v572
        %v624 = vmul.f32 %v572, %v623
        %vm625 = vcmp.eq.f32.partialorder %v572, inf
        %v626 = vsel %vm625, %v572, %v624
        %vm627 = vcmp.eq.f32.partialorder %v572, 0.0
        %v628 = vand.u32 %v572, 2147483648
        %v629 = vsel %vm627, %v628, %v626
        %v630 = vrsqrt.pop %v574
        %v631 = vmul.f32 %v574, %v630
        %vm632 = vcmp.eq.f32.partialorder %v574, inf
        %v633 = vsel %vm632, %v574, %v631
        %vm634 = vcmp.eq.f32.partialorder %v574, 0.0
        %v635 = vand.u32 %v574, 2147483648
        %v636 = vsel %vm634, %v635, %v633
        %v637 = vrsqrt.pop %v576
        %v638 = vmul.f32 %v576, %v637
        %vm639 = vcmp.eq.f32.partialorder %v576, inf
        %v640 = vsel %vm639, %v576, %v638
        %vm641 = vcmp.eq.f32.partialorder %v576, 0.0
        %v642 = vand.u32 %v576, 2147483648
        %v643 = vsel %vm641, %v642, %v640
        %v644 = vrsqrt.pop %v578
        %v645 = vmul.f32 %v578, %v644
        %vm646 = vcmp.eq.f32.partialorder %v578, inf
        %v647 = vsel %vm646, %v578, %v645
        %vm648 = vcmp.eq.f32.partialorder %v578, 0.0
        %v649 = vand.u32 %v578, 2147483648
        %v650 = vsel %vm648, %v649, %v647
        %v651 = vrsqrt.pop %v580
        %v652 = vmul.f32 %v580, %v651
        %vm653 = vcmp.eq.f32.partialorder %v580, inf
        %v654 = vsel %vm653, %v580, %v652
        %vm655 = vcmp.eq.f32.partialorder %v580, 0.0
        %v656 = vand.u32 %v580, 2147483648
        %v657 = vsel %vm655, %v656, %v654
        %v658 = vrsqrt.pop %v582
        %v659 = vmul.f32 %v582, %v658
        %vm660 = vcmp.eq.f32.partialorder %v582, inf
        %v661 = vsel %vm660, %v582, %v659
        %vm662 = vcmp.eq.f32.partialorder %v582, 0.0
        %v663 = vand.u32 %v582, 2147483648
        %v664 = vsel %vm662, %v663, %v661
        %v665 = vrsqrt.pop %v584
        %v666 = vmul.f32 %v584, %v665
        %vm667 = vcmp.eq.f32.partialorder %v584, inf
        %v668 = vsel %vm667, %v584, %v666
        %vm669 = vcmp.eq.f32.partialorder %v584, 0.0
        %v670 = vand.u32 %v584, 2147483648
        %v671 = vsel %vm669, %v670, %v668
        %v672 = vrsqrt.pop %v586
        %v673 = vmul.f32 %v586, %v672
        %vm674 = vcmp.eq.f32.partialorder %v586, inf
        %v675 = vsel %vm674, %v586, %v673
        %vm676 = vcmp.eq.f32.partialorder %v586, 0.0
        %v677 = vand.u32 %v586, 2147483648
        %v678 = vsel %vm676, %v677, %v675
        %v679 = vrsqrt.pop %v588
        %v680 = vmul.f32 %v588, %v679
        %vm681 = vcmp.eq.f32.partialorder %v588, inf
        %v682 = vsel %vm681, %v588, %v680
        %vm683 = vcmp.eq.f32.partialorder %v588, 0.0
        %v684 = vand.u32 %v588, 2147483648
        %v685 = vsel %vm683, %v684, %v682
        %v686 = vrsqrt.pop %v590
        %v687 = vmul.f32 %v590, %v686
        %vm688 = vcmp.eq.f32.partialorder %v590, inf
        %v689 = vsel %vm688, %v590, %v687
        %vm690 = vcmp.eq.f32.partialorder %v590, 0.0
        %v691 = vand.u32 %v590, 2147483648
        %v692 = vsel %vm690, %v691, %v689
        %v693 = vrsqrt.pop %v592
        %v694 = vmul.f32 %v592, %v693
        %vm695 = vcmp.eq.f32.partialorder %v592, inf
        %v696 = vsel %vm695, %v592, %v694
        %vm697 = vcmp.eq.f32.partialorder %v592, 0.0
        %v698 = vand.u32 %v592, 2147483648
        %v699 = vsel %vm697, %v698, %v696
        %v700 = vrsqrt.pop %v594
        %v701 = vmul.f32 %v594, %v700
        %vm702 = vcmp.eq.f32.partialorder %v594, inf
        %v703 = vsel %vm702, %v594, %v701
        %vm704 = vcmp.eq.f32.partialorder %v594, 0.0
        %v705 = vand.u32 %v594, 2147483648
        %v706 = vsel %vm704, %v705, %v703
        %v723 = vlaneseq
        %v724 = vand.u32 %v723, 127
        %v725 = vlaneseq
        %v726 = vshrl.u32 %v725, 7
        %v727 = vsub.s32 %v724, %v726
        %v728 = vrot.slane %v601, %v727
        %v729 = vlaneseq
        %v730 = vshrl.u32 %v729, 7
        %v731 = vsub.s32 %v724, %v730
        %v732 = vrot.slane %v608, %v731
        %v733 = vlaneseq
        %v734 = vshrl.u32 %v733, 7
        %v735 = vsub.s32 %v724, %v734
        %v736 = vrot.slane %v615, %v735
        %v737 = vlaneseq
        %v738 = vshrl.u32 %v737, 7
        %v739 = vsub.s32 %v724, %v738
        %v740 = vrot.slane %v622, %v739
        %v741 = vlaneseq
        %v742 = vshrl.u32 %v741, 7
        %v743 = vsub.s32 %v724, %v742
        %v744 = vrot.slane %v629, %v743
        %v745 = vlaneseq
        %v746 = vshrl.u32 %v745, 7
        %v747 = vsub.s32 %v724, %v746
        %v748 = vrot.slane %v636, %v747
        %v749 = vlaneseq
        %v750 = vshrl.u32 %v749, 7
        %v751 = vsub.s32 %v724, %v750
        %v752 = vrot.slane %v643, %v751
        %v753 = vlaneseq
        %v754 = vshrl.u32 %v753, 7
        %v755 = vsub.s32 %v724, %v754
        %v756 = vrot.slane %v650, %v755
        %v757 = vlaneseq
        %v758 = vshrl.u32 %v757, 7
        %v759 = vsub.s32 %v724, %v758
        %v760 = vrot.slane %v657, %v759
        %v761 = vlaneseq
        %v762 = vshrl.u32 %v761, 7
        %v763 = vsub.s32 %v724, %v762
        %v764 = vrot.slane %v664, %v763
        %v765 = vlaneseq
        %v766 = vshrl.u32 %v765, 7
        %v767 = vsub.s32 %v724, %v766
        %v768 = vrot.slane %v671, %v767
        %v769 = vlaneseq
        %v770 = vshrl.u32 %v769, 7
        %v771 = vsub.s32 %v724, %v770
        %v772 = vrot.slane %v678, %v771
        %v773 = vlaneseq
        %v774 = vshrl.u32 %v773, 7
        %v775 = vsub.s32 %v724, %v774
        %v776 = vrot.slane %v685, %v775
        %v777 = vlaneseq
        %v778 = vshrl.u32 %v777, 7
        %v779 = vsub.s32 %v724, %v778
        %v780 = vrot.slane %v692, %v779
        %v781 = vlaneseq
        %v782 = vshrl.u32 %v781, 7
        %v783 = vsub.s32 %v724, %v782
        %v784 = vrot.slane %v699, %v783
        %v785 = vlaneseq
        %v786 = vshrl.u32 %v785, 7
        %v787 = vsub.s32 %v724, %v786
        %v788 = vrot.slane %v706, %v787
        %vm789 = vcmask 1041409
        %v790 = vsel %vm789, %v732, %v728
        %vm791 = vcmask 1042434
        %v792 = vsel %vm791, %v736, %v790
        %vm793 = vcmask 1043459
        %v794 = vsel %vm793, %v740, %v792
        %vm795 = vcmask 1044484
        %v796 = vsel %vm795, %v744, %v794
        %vm797 = vcmask 1045509
        %v798 = vsel %vm797, %v748, %v796
        %vm799 = vcmask 1046534
        %v800 = vsel %vm799, %v752, %v798
        %vm801 = vcmask 1047559
        %v802 = vsel %vm801, %v756, %v800
        %v803 = vsel %vm789, %v764, %v760
        %v804 = vsel %vm791, %v768, %v803
        %v805 = vsel %vm793, %v772, %v804
        %v806 = vsel %vm795, %v776, %v805
        %v807 = vsel %vm797, %v780, %v806
        %v808 = vsel %vm799, %v784, %v807
        %v809 = vsel %vm801, %v788, %v808
        %v812 = vmul.f32 %v349, %v802
        %v813 = vmul.f32 %v350, %v809
        %vm814 = vcmp.gt.f32.partialorder %v812, 1e-12
        %vm815 = vcmp.gt.f32.partialorder %v813, 1e-12
        %v816 = vmax.f32 %v564, 1e-36
        %v817 = vmax.f32 %v566, 1e-36
        %v818 = vmax.f32 %v568, 1e-36
        %v819 = vmax.f32 %v570, 1e-36
        %v820 = vmax.f32 %v572, 1e-36
        %v821 = vmax.f32 %v574, 1e-36
        %v822 = vmax.f32 %v576, 1e-36
        %v823 = vmax.f32 %v578, 1e-36
        %v824 = vmax.f32 %v580, 1e-36
        %v825 = vmax.f32 %v582, 1e-36
        %v826 = vmax.f32 %v584, 1e-36
        %v827 = vmax.f32 %v586, 1e-36
        %v828 = vmax.f32 %v588, 1e-36
        %v829 = vmax.f32 %v590, 1e-36
        %v830 = vmax.f32 %v592, 1e-36
        %v831 = vmax.f32 %v594, 1e-36
        %v832 = vrsqrt.pop %v816
        %v833 = vrsqrt.pop %v817
        %v834 = vrsqrt.pop %v818
        %v835 = vrsqrt.pop %v819
        %v836 = vrsqrt.pop %v820
        %v837 = vrsqrt.pop %v821
        %v838 = vrsqrt.pop %v822
        %v839 = vrsqrt.pop %v823
        %v840 = vrsqrt.pop %v824
        %v841 = vrsqrt.pop %v825
        %v842 = vrsqrt.pop %v826
        %v843 = vrsqrt.pop %v827
        %v844 = vrsqrt.pop %v828
        %v845 = vrsqrt.pop %v829
        %v846 = vrsqrt.pop %v830
        %v847 = vrsqrt.pop %v831
        %v848 = vmul.f32 %v349, 1e+12
        %v849 = vmul.f32 %v350, 1e+12
        %v866 = vlaneseq
        %v867 = vshrl.u32 %v866, 7
        %v868 = vsub.s32 %v724, %v867
        %v869 = vrot.slane %v832, %v868
        %v870 = vlaneseq
        %v871 = vshrl.u32 %v870, 7
        %v872 = vsub.s32 %v724, %v871
        %v873 = vrot.slane %v833, %v872
        %v874 = vlaneseq
        %v875 = vshrl.u32 %v874, 7
        %v876 = vsub.s32 %v724, %v875
        %v877 = vrot.slane %v834, %v876
        %v878 = vlaneseq
        %v879 = vshrl.u32 %v878, 7
        %v880 = vsub.s32 %v724, %v879
        %v881 = vrot.slane %v835, %v880
        %v882 = vlaneseq
        %v883 = vshrl.u32 %v882, 7
        %v884 = vsub.s32 %v724, %v883
        %v885 = vrot.slane %v836, %v884
        %v886 = vlaneseq
        %v887 = vshrl.u32 %v886, 7
        %v888 = vsub.s32 %v724, %v887
        %v889 = vrot.slane %v837, %v888
        %v890 = vlaneseq
        %v891 = vshrl.u32 %v890, 7
        %v892 = vsub.s32 %v724, %v891
        %v893 = vrot.slane %v838, %v892
        %v894 = vlaneseq
        %v895 = vshrl.u32 %v894, 7
        %v896 = vsub.s32 %v724, %v895
        %v897 = vrot.slane %v839, %v896
        %v898 = vlaneseq
        %v899 = vshrl.u32 %v898, 7
        %v900 = vsub.s32 %v724, %v899
        %v901 = vrot.slane %v840, %v900
        %v902 = vlaneseq
        %v903 = vshrl.u32 %v902, 7
        %v904 = vsub.s32 %v724, %v903
        %v905 = vrot.slane %v841, %v904
        %v906 = vlaneseq
        %v907 = vshrl.u32 %v906, 7
        %v908 = vsub.s32 %v724, %v907
        %v909 = vrot.slane %v842, %v908
        %v910 = vlaneseq
        %v911 = vshrl.u32 %v910, 7
        %v912 = vsub.s32 %v724, %v911
        %v913 = vrot.slane %v843, %v912
        %v914 = vlaneseq
        %v915 = vshrl.u32 %v914, 7
        %v916 = vsub.s32 %v724, %v915
        %v917 = vrot.slane %v844, %v916
        %v918 = vlaneseq
        %v919 = vshrl.u32 %v918, 7
        %v920 = vsub.s32 %v724, %v919
        %v921 = vrot.slane %v845, %v920
        %v922 = vlaneseq
        %v923 = vshrl.u32 %v922, 7
        %v924 = vsub.s32 %v724, %v923
        %v925 = vrot.slane %v846, %v924
        %v926 = vlaneseq
        %v927 = vshrl.u32 %v926, 7
        %v928 = vsub.s32 %v724, %v927
        %v929 = vrot.slane %v847, %v928
        %v930 = vsel %vm789, %v873, %v869
        %v931 = vsel %vm791, %v877, %v930
        %v932 = vsel %vm793, %v881, %v931
        %v933 = vsel %vm795, %v885, %v932
        %v934 = vsel %vm797, %v889, %v933
        %v935 = vsel %vm799, %v893, %v934
        %v936 = vsel %vm801, %v897, %v935
        %v937 = vsel %vm789, %v905, %v901
        %v938 = vsel %vm791, %v909, %v937
        %v939 = vsel %vm793, %v913, %v938
        %v940 = vsel %vm795, %v917, %v939
        %v941 = vsel %vm797, %v921, %v940
        %v942 = vsel %vm799, %v925, %v941
        %v943 = vsel %vm801, %v929, %v942
        %v946 = vsel %vm814, %v936, %v848
        %v947 = vsel %vm815, %v943, %v849
        %v950 = vlaneseq
        %v951 = vshrl.u32 %v950, 7
        %v952 = vsub.s32 0, %v951
        %v953 = vrot.slane %v946, %v952
        %955 = vbcast.lane.b32.xlu0 %v953, 256
        %v956 = vpop.permute.xlu0 %955
        %v957 = vlaneseq
        %v958 = vshrl.u32 %v957, 7
        %v959 = vsub.s32 1, %v958
        %v960 = vrot.slane %v946, %v959
        %962 = vbcast.lane.b32.xlu0 %v960, 256
        %v963 = vpop.permute.xlu0 %962
        %v964 = vlaneseq
        %v965 = vshrl.u32 %v964, 7
        %v966 = vsub.s32 2, %v965
        %v967 = vrot.slane %v946, %v966
        %969 = vbcast.lane.b32.xlu0 %v967, 256
        %v970 = vpop.permute.xlu0 %969
        %v971 = vlaneseq
        %v972 = vshrl.u32 %v971, 7
        %v973 = vsub.s32 3, %v972
        %v974 = vrot.slane %v946, %v973
        %976 = vbcast.lane.b32.xlu0 %v974, 256
        %v977 = vpop.permute.xlu0 %976
        %v978 = vlaneseq
        %v979 = vshrl.u32 %v978, 7
        %v980 = vsub.s32 4, %v979
        %v981 = vrot.slane %v946, %v980
        %983 = vbcast.lane.b32.xlu0 %v981, 256
        %v984 = vpop.permute.xlu0 %983
        %v985 = vlaneseq
        %v986 = vshrl.u32 %v985, 7
        %v987 = vsub.s32 5, %v986
        %v988 = vrot.slane %v946, %v987
        %990 = vbcast.lane.b32.xlu0 %v988, 256
        %v991 = vpop.permute.xlu0 %990
        %v992 = vlaneseq
        %v993 = vshrl.u32 %v992, 7
        %v994 = vsub.s32 6, %v993
        %v995 = vrot.slane %v946, %v994
        %997 = vbcast.lane.b32.xlu0 %v995, 256
        %v998 = vpop.permute.xlu0 %997
        %v999 = vlaneseq
        %v1000 = vshrl.u32 %v999, 7
        %v1001 = vsub.s32 7, %v1000
        %v1002 = vrot.slane %v946, %v1001
        %1004 = vbcast.lane.b32.xlu0 %v1002, 256
        %v1005 = vpop.permute.xlu0 %1004
        %v1006 = vlaneseq
        %v1007 = vshrl.u32 %v1006, 7
        %v1008 = vsub.s32 0, %v1007
        %v1009 = vrot.slane %v947, %v1008
        %1011 = vbcast.lane.b32.xlu0 %v1009, 256
        %v1012 = vpop.permute.xlu0 %1011
        %v1013 = vlaneseq
        %v1014 = vshrl.u32 %v1013, 7
        %v1015 = vsub.s32 1, %v1014
        %v1016 = vrot.slane %v947, %v1015
        %1018 = vbcast.lane.b32.xlu0 %v1016, 256
        %v1019 = vpop.permute.xlu0 %1018
        %v1020 = vlaneseq
        %v1021 = vshrl.u32 %v1020, 7
        %v1022 = vsub.s32 2, %v1021
        %v1023 = vrot.slane %v947, %v1022
        %1025 = vbcast.lane.b32.xlu0 %v1023, 256
        %v1026 = vpop.permute.xlu0 %1025
        %v1027 = vlaneseq
        %v1028 = vshrl.u32 %v1027, 7
        %v1029 = vsub.s32 3, %v1028
        %v1030 = vrot.slane %v947, %v1029
        %1032 = vbcast.lane.b32.xlu0 %v1030, 256
        %v1033 = vpop.permute.xlu0 %1032
        %v1034 = vlaneseq
        %v1035 = vshrl.u32 %v1034, 7
        %v1036 = vsub.s32 4, %v1035
        %v1037 = vrot.slane %v947, %v1036
        %1039 = vbcast.lane.b32.xlu0 %v1037, 256
        %v1040 = vpop.permute.xlu0 %1039
        %v1041 = vlaneseq
        %v1042 = vshrl.u32 %v1041, 7
        %v1043 = vsub.s32 5, %v1042
        %v1044 = vrot.slane %v947, %v1043
        %1046 = vbcast.lane.b32.xlu0 %v1044, 256
        %v1047 = vpop.permute.xlu0 %1046
        %v1048 = vlaneseq
        %v1049 = vshrl.u32 %v1048, 7
        %v1050 = vsub.s32 6, %v1049
        %v1051 = vrot.slane %v947, %v1050
        %1053 = vbcast.lane.b32.xlu0 %v1051, 256
        %v1054 = vpop.permute.xlu0 %1053
        %v1055 = vlaneseq
        %v1056 = vshrl.u32 %v1055, 7
        %v1057 = vsub.s32 7, %v1056
        %v1058 = vrot.slane %v947, %v1057
        %1060 = vbcast.lane.b32.xlu0 %v1058, 256
        %v1061 = vpop.permute.xlu0 %1060
        %v1078 = vmul.f32 %v564, %v956
        %v1079 = vmul.f32 %v566, %v963
        %v1080 = vmul.f32 %v568, %v970
        %v1081 = vmul.f32 %v570, %v977
        %v1082 = vmul.f32 %v572, %v984
        %v1083 = vmul.f32 %v574, %v991
        %v1084 = vmul.f32 %v576, %v998
        %v1085 = vmul.f32 %v578, %v1005
        %v1086 = vmul.f32 %v580, %v1012
        %v1087 = vmul.f32 %v582, %v1019
        %v1088 = vmul.f32 %v584, %v1026
        %v1089 = vmul.f32 %v586, %v1033
        %v1090 = vmul.f32 %v588, %v1040
        %v1091 = vmul.f32 %v590, %v1047
        %v1092 = vmul.f32 %v592, %v1054
        %v1093 = vmul.f32 %v594, %v1061
        %v1094 = vmul.f32 %v1078, %v956
        %v1095 = vmul.f32 %v1079, %v963
        %v1096 = vmul.f32 %v1080, %v970
        %v1097 = vmul.f32 %v1081, %v977
        %v1098 = vmul.f32 %v1082, %v984
        %v1099 = vmul.f32 %v1083, %v991
        %v1100 = vmul.f32 %v1084, %v998
        %v1101 = vmul.f32 %v1085, %v1005
        %v1102 = vmul.f32 %v1086, %v1012
        %v1103 = vmul.f32 %v1087, %v1019
        %v1104 = vmul.f32 %v1088, %v1026
        %v1105 = vmul.f32 %v1089, %v1033
        %v1106 = vmul.f32 %v1090, %v1040
        %v1107 = vmul.f32 %v1091, %v1047
        %v1108 = vmul.f32 %v1092, %v1054
        %v1109 = vmul.f32 %v1093, %v1061
        %1126 = vset.pattern.permute.xlu0 0
        %1127 = vperm.xlu0 %1126, %v1094
        %v1128 = vpop.permute.xlu0 %1127
        %1129 = vset.pattern.permute.xlu0 0
        %1130 = vperm.xlu0 %1129, %v1095
        %v1131 = vpop.permute.xlu0 %1130
        %1132 = vset.pattern.permute.xlu0 0
        %1133 = vperm.xlu0 %1132, %v1096
        %v1134 = vpop.permute.xlu0 %1133
        %1135 = vset.pattern.permute.xlu0 0
        %1136 = vperm.xlu0 %1135, %v1097
        %v1137 = vpop.permute.xlu0 %1136
        %1138 = vset.pattern.permute.xlu0 0
        %1139 = vperm.xlu0 %1138, %v1098
        %v1140 = vpop.permute.xlu0 %1139
        %1141 = vset.pattern.permute.xlu0 0
        %1142 = vperm.xlu0 %1141, %v1099
        %v1143 = vpop.permute.xlu0 %1142
        %1144 = vset.pattern.permute.xlu0 0
        %1145 = vperm.xlu0 %1144, %v1100
        %v1146 = vpop.permute.xlu0 %1145
        %1147 = vset.pattern.permute.xlu0 0
        %1148 = vperm.xlu0 %1147, %v1101
        %v1149 = vpop.permute.xlu0 %1148
        %1150 = vset.pattern.permute.xlu0 0
        %1151 = vperm.xlu0 %1150, %v1102
        %v1152 = vpop.permute.xlu0 %1151
        %1153 = vset.pattern.permute.xlu0 0
        %1154 = vperm.xlu0 %1153, %v1103
        %v1155 = vpop.permute.xlu0 %1154
        %1156 = vset.pattern.permute.xlu0 0
        %1157 = vperm.xlu0 %1156, %v1104
        %v1158 = vpop.permute.xlu0 %1157
        %1159 = vset.pattern.permute.xlu0 0
        %1160 = vperm.xlu0 %1159, %v1105
        %v1161 = vpop.permute.xlu0 %1160
        %1162 = vset.pattern.permute.xlu0 0
        %1163 = vperm.xlu0 %1162, %v1106
        %v1164 = vpop.permute.xlu0 %1163
        %1165 = vset.pattern.permute.xlu0 0
        %1166 = vperm.xlu0 %1165, %v1107
        %v1167 = vpop.permute.xlu0 %1166
        %1168 = vset.pattern.permute.xlu0 0
        %1169 = vperm.xlu0 %1168, %v1108
        %v1170 = vpop.permute.xlu0 %1169
        %1171 = vset.pattern.permute.xlu0 0
        %1172 = vperm.xlu0 %1171, %v1109
        %v1173 = vpop.permute.xlu0 %1172
        %v1174 = vlaneseq
        %v1175 = vshrl.u32 %v1174, 7
        %v1176 = vsub.s32 %v724, %v1175
        %v1177 = vrot.slane %v1128, %v1176
        %v1178 = vlaneseq
        %v1179 = vshrl.u32 %v1178, 7
        %v1180 = vsub.s32 %v724, %v1179
        %v1181 = vrot.slane %v1131, %v1180
        %v1182 = vlaneseq
        %v1183 = vshrl.u32 %v1182, 7
        %v1184 = vsub.s32 %v724, %v1183
        %v1185 = vrot.slane %v1134, %v1184
        %v1186 = vlaneseq
        %v1187 = vshrl.u32 %v1186, 7
        %v1188 = vsub.s32 %v724, %v1187
        %v1189 = vrot.slane %v1137, %v1188
        %v1190 = vlaneseq
        %v1191 = vshrl.u32 %v1190, 7
        %v1192 = vsub.s32 %v724, %v1191
        %v1193 = vrot.slane %v1140, %v1192
        %v1194 = vlaneseq
        %v1195 = vshrl.u32 %v1194, 7
        %v1196 = vsub.s32 %v724, %v1195
        %v1197 = vrot.slane %v1143, %v1196
        %v1198 = vlaneseq
        %v1199 = vshrl.u32 %v1198, 7
        %v1200 = vsub.s32 %v724, %v1199
        %v1201 = vrot.slane %v1146, %v1200
        %v1202 = vlaneseq
        %v1203 = vshrl.u32 %v1202, 7
        %v1204 = vsub.s32 %v724, %v1203
        %v1205 = vrot.slane %v1149, %v1204
        %v1206 = vlaneseq
        %v1207 = vshrl.u32 %v1206, 7
        %v1208 = vsub.s32 %v724, %v1207
        %v1209 = vrot.slane %v1152, %v1208
        %v1210 = vlaneseq
        %v1211 = vshrl.u32 %v1210, 7
        %v1212 = vsub.s32 %v724, %v1211
        %v1213 = vrot.slane %v1155, %v1212
        %v1214 = vlaneseq
        %v1215 = vshrl.u32 %v1214, 7
        %v1216 = vsub.s32 %v724, %v1215
        %v1217 = vrot.slane %v1158, %v1216
        %v1218 = vlaneseq
        %v1219 = vshrl.u32 %v1218, 7
        %v1220 = vsub.s32 %v724, %v1219
        %v1221 = vrot.slane %v1161, %v1220
        %v1222 = vlaneseq
        %v1223 = vshrl.u32 %v1222, 7
        %v1224 = vsub.s32 %v724, %v1223
        %v1225 = vrot.slane %v1164, %v1224
        %v1226 = vlaneseq
        %v1227 = vshrl.u32 %v1226, 7
        %v1228 = vsub.s32 %v724, %v1227
        %v1229 = vrot.slane %v1167, %v1228
        %v1230 = vlaneseq
        %v1231 = vshrl.u32 %v1230, 7
        %v1232 = vsub.s32 %v724, %v1231
        %v1233 = vrot.slane %v1170, %v1232
        %v1234 = vlaneseq
        %v1235 = vshrl.u32 %v1234, 7
        %v1236 = vsub.s32 %v724, %v1235
        %v1237 = vrot.slane %v1173, %v1236
        %v1238 = vsel %vm789, %v1181, %v1177
        %v1239 = vsel %vm791, %v1185, %v1238
        %v1240 = vsel %vm793, %v1189, %v1239
        %v1241 = vsel %vm795, %v1193, %v1240
        %v1242 = vsel %vm797, %v1197, %v1241
        %v1243 = vsel %vm799, %v1201, %v1242
        %v1244 = vsel %vm801, %v1205, %v1243
        %v1245 = vsel %vm789, %v1213, %v1209
        %v1246 = vsel %vm791, %v1217, %v1245
        %v1247 = vsel %vm793, %v1221, %v1246
        %v1248 = vsel %vm795, %v1225, %v1247
        %v1249 = vsel %vm797, %v1229, %v1248
        %v1250 = vsel %vm799, %v1233, %v1249
        %v1251 = vsel %vm801, %v1237, %v1250
        %v1254 = vsel %vm328, %v1244, 0.0
        %1255 = vadd.xlane.f32.xlu0 %v1254
        %v1256 = vpop.xlane.xlu0 %1255
        %v1257 = vsel %vm328, %v1251, 0.0
        %1258 = vadd.xlane.f32.xlu0 %v1257
        %v1259 = vpop.xlane.xlu0 %1258
        %v1260 = vmax.f32 %v1256, 1e-24
        %v1261 = vmax.f32 %v1259, 1e-24
        %v1262 = vrsqrt.pop %v1260
        %v1263 = vrsqrt.pop %v1261
        %v1264 = vmul.f32 %v946, %v1262
        %v1265 = vmul.f32 %v947, %v1263
        %v1266 = vlaneseq
        %v1267 = vshrl.u32 %v1266, 7
        %v1268 = vsub.s32 0, %v1267
        %v1269 = vrot.slane %v1264, %v1268
        %1271 = vbcast.lane.b32.xlu0 %v1269, 256
        %v1272 = vpop.permute.xlu0 %1271
        %v1273 = vlaneseq
        %v1274 = vshrl.u32 %v1273, 7
        %v1275 = vsub.s32 1, %v1274
        %v1276 = vrot.slane %v1264, %v1275
        %1278 = vbcast.lane.b32.xlu0 %v1276, 256
        %v1279 = vpop.permute.xlu0 %1278
        %v1280 = vlaneseq
        %v1281 = vshrl.u32 %v1280, 7
        %v1282 = vsub.s32 2, %v1281
        %v1283 = vrot.slane %v1264, %v1282
        %1285 = vbcast.lane.b32.xlu0 %v1283, 256
        %v1286 = vpop.permute.xlu0 %1285
        %v1287 = vlaneseq
        %v1288 = vshrl.u32 %v1287, 7
        %v1289 = vsub.s32 3, %v1288
        %v1290 = vrot.slane %v1264, %v1289
        %1292 = vbcast.lane.b32.xlu0 %v1290, 256
        %v1293 = vpop.permute.xlu0 %1292
        %v1294 = vlaneseq
        %v1295 = vshrl.u32 %v1294, 7
        %v1296 = vsub.s32 4, %v1295
        %v1297 = vrot.slane %v1264, %v1296
        %1299 = vbcast.lane.b32.xlu0 %v1297, 256
        %v1300 = vpop.permute.xlu0 %1299
        %v1301 = vlaneseq
        %v1302 = vshrl.u32 %v1301, 7
        %v1303 = vsub.s32 5, %v1302
        %v1304 = vrot.slane %v1264, %v1303
        %1306 = vbcast.lane.b32.xlu0 %v1304, 256
        %v1307 = vpop.permute.xlu0 %1306
        %v1308 = vlaneseq
        %v1309 = vshrl.u32 %v1308, 7
        %v1310 = vsub.s32 6, %v1309
        %v1311 = vrot.slane %v1264, %v1310
        %1313 = vbcast.lane.b32.xlu0 %v1311, 256
        %v1314 = vpop.permute.xlu0 %1313
        %v1315 = vlaneseq
        %v1316 = vshrl.u32 %v1315, 7
        %v1317 = vsub.s32 7, %v1316
        %v1318 = vrot.slane %v1264, %v1317
        %1320 = vbcast.lane.b32.xlu0 %v1318, 256
        %v1321 = vpop.permute.xlu0 %1320
        %v1322 = vlaneseq
        %v1323 = vshrl.u32 %v1322, 7
        %v1324 = vsub.s32 0, %v1323
        %v1325 = vrot.slane %v1265, %v1324
        %1327 = vbcast.lane.b32.xlu0 %v1325, 256
        %v1328 = vpop.permute.xlu0 %1327
        %v1329 = vlaneseq
        %v1330 = vshrl.u32 %v1329, 7
        %v1331 = vsub.s32 1, %v1330
        %v1332 = vrot.slane %v1265, %v1331
        %1334 = vbcast.lane.b32.xlu0 %v1332, 256
        %v1335 = vpop.permute.xlu0 %1334
        %v1336 = vlaneseq
        %v1337 = vshrl.u32 %v1336, 7
        %v1338 = vsub.s32 2, %v1337
        %v1339 = vrot.slane %v1265, %v1338
        %1341 = vbcast.lane.b32.xlu0 %v1339, 256
        %v1342 = vpop.permute.xlu0 %1341
        %v1343 = vlaneseq
        %v1344 = vshrl.u32 %v1343, 7
        %v1345 = vsub.s32 3, %v1344
        %v1346 = vrot.slane %v1265, %v1345
        %1348 = vbcast.lane.b32.xlu0 %v1346, 256
        %v1349 = vpop.permute.xlu0 %1348
        %v1350 = vlaneseq
        %v1351 = vshrl.u32 %v1350, 7
        %v1352 = vsub.s32 4, %v1351
        %v1353 = vrot.slane %v1265, %v1352
        %1355 = vbcast.lane.b32.xlu0 %v1353, 256
        %v1356 = vpop.permute.xlu0 %1355
        %v1357 = vlaneseq
        %v1358 = vshrl.u32 %v1357, 7
        %v1359 = vsub.s32 5, %v1358
        %v1360 = vrot.slane %v1265, %v1359
        %1362 = vbcast.lane.b32.xlu0 %v1360, 256
        %v1363 = vpop.permute.xlu0 %1362
        %v1364 = vlaneseq
        %v1365 = vshrl.u32 %v1364, 7
        %v1366 = vsub.s32 6, %v1365
        %v1367 = vrot.slane %v1265, %v1366
        %1369 = vbcast.lane.b32.xlu0 %v1367, 256
        %v1370 = vpop.permute.xlu0 %1369
        %v1371 = vlaneseq
        %v1372 = vshrl.u32 %v1371, 7
        %v1373 = vsub.s32 7, %v1372
        %v1374 = vrot.slane %v1265, %v1373
        %1376 = vbcast.lane.b32.xlu0 %v1374, 256
        %v1377 = vpop.permute.xlu0 %1376
        %v1378 = vmul.f32 %v531, %v1272
        %v1379 = vmul.f32 %v532, %v1279
        %v1380 = vmul.f32 %v533, %v1286
        %v1381 = vmul.f32 %v534, %v1293
        %v1382 = vmul.f32 %v535, %v1300
        %v1383 = vmul.f32 %v536, %v1307
        %v1384 = vmul.f32 %v537, %v1314
        %v1385 = vmul.f32 %v538, %v1321
        %v1386 = vmul.f32 %v539, %v1328
        %v1387 = vmul.f32 %v540, %v1335
        %v1388 = vmul.f32 %v541, %v1342
        %v1389 = vmul.f32 %v542, %v1349
        %v1390 = vmul.f32 %v543, %v1356
        %v1391 = vmul.f32 %v544, %v1363
        %v1392 = vmul.f32 %v545, %v1370
        %v1393 = vmul.f32 %v546, %v1377
        %v1394 = vpack.c.bf16 %v1378, %v1378
        %v1395 = vpack.c.bf16 %v1379, %v1379
        %v1396 = vpack.c.bf16 %v1380, %v1380
        %v1397 = vpack.c.bf16 %v1381, %v1381
        %v1398 = vpack.c.bf16 %v1382, %v1382
        %v1399 = vpack.c.bf16 %v1383, %v1383
        %v1400 = vpack.c.bf16 %v1384, %v1384
        %v1401 = vpack.c.bf16 %v1385, %v1385
        %v1402 = vpack.c.bf16 %v1386, %v1386
        %v1403 = vpack.c.bf16 %v1387, %v1387
        %v1404 = vpack.c.bf16 %v1388, %v1388
        %v1405 = vpack.c.bf16 %v1389, %v1389
        %v1406 = vpack.c.bf16 %v1390, %v1390
        %v1407 = vpack.c.bf16 %v1391, %v1391
        %v1408 = vpack.c.bf16 %v1392, %v1392
        %v1409 = vpack.c.bf16 %v1393, %v1393
        %1410 = vst [vmem:[%s215] sm:$0xf] %v1394
        %1411 = vst [vmem:[%s215 + $0x4] sm:$0xf] %v1395
        %1412 = vst [vmem:[%s215 + $0x8] sm:$0xf] %v1396
        %1413 = vst [vmem:[%s215 + $0xc] sm:$0xf] %v1397
        %1414 = vst [vmem:[%s215 + $0x10] sm:$0xf] %v1398
        %1415 = vst [vmem:[%s215 + $0x14] sm:$0xf] %v1399
        %1416 = vst [vmem:[%s215 + $0x18] sm:$0xf] %v1400
        %1417 = vst [vmem:[%s215 + $0x1c] sm:$0xf] %v1401
        %1418 = vst [vmem:[%s215 + $0x20] sm:$0xf] %v1402
        %1419 = vst [vmem:[%s215 + $0x24] sm:$0xf] %v1403
        %1420 = vst [vmem:[%s215 + $0x28] sm:$0xf] %v1404
        %1421 = vst [vmem:[%s215 + $0x2c] sm:$0xf] %v1405
        %1422 = vst [vmem:[%s215 + $0x30] sm:$0xf] %v1406
        %1423 = vst [vmem:[%s215 + $0x34] sm:$0xf] %v1407
        %1424 = vst [vmem:[%s215 + $0x38] sm:$0xf] %v1408
        %1425 = vst [vmem:[%s215 + $0x3c] sm:$0xf] %v1409
        %s1426 = sand.u32 %s131, 1
        %s1427 = scalar_lea.sflag [#allocation3], %s1426
        %s1428 = sand.u32 %s131, 1
        %s1429 = smul.addr %s1428, 64
        %s1430 = scalar_lea.vmem [#allocation2], %s1429
        // Predicated region
        $region37: #{tpu_custom_call.1} parent=35 // pred_check
          %p1431 = pneg %p141
        $region38: #{tpu_custom_call.1} parent=35 // pred_check_branch
          %1433 = sbr.rel (%p1431) target = $region40
        $region39: #{tpu_custom_call.1} parent=35 // pred_region
          %s1434 = smul.u32 16, %s23
          %s1436 = ssub.s32 1024, 1024
          %1437 = vsyncadd %s1427, %s1436
          %s1438 = smul.addr %s22, 16
          %s1439 = sadd.s32 %s1434, %s1438
          %s1440 = smul.addr %s1439, 64
          %s1441 = scalar_lea.hbm %s4, %s1440
          %s1442 = sshll.u32 %s1430, 4
          %s1443 = int_to_ptr.vmem [resolvable:$true] %s1442
          %1448 = dma.vmem_to_hbm [thread:$0]  %s1443, 1024, %s1441, %s1427, 64, 64, 4
        $region40: #{tpu_custom_call.1} parent=35 // pred_fallthru
          _
      $region36: #{tpu_custom_call.1} parent=5 // pred_fallthru
        _
      %p1449 = scmp.le.s32.totalorder 2, %s13
      // Predicated region
      $region41: #{tpu_custom_call.1} parent=5 // pred_check
        %p1450 = pneg %p1449
      $region42: #{tpu_custom_call.1} parent=5 // pred_check_branch
        %1452 = sbr.rel (%p1450) target = $region44
      $region43: #{tpu_custom_call.1} parent=5 // pred_region
        %s1453 = ssub.s32 %s13, 2
        // Predicated region
        $region45: #{tpu_custom_call.1} parent=43 // pred_check
          %p1454 = pneg %p147
        $region46: #{tpu_custom_call.1} parent=43 // pred_check_branch
          %1456 = sbr.rel (%p1454) target = $region48
        $region47: #{tpu_custom_call.1} parent=43 // pred_region
          %s1457 = sand.u32 %s132, 1
          %s1458 = scalar_lea.sflag [#allocation3], %s1457
          %s1459 = sand.u32 %s132, 1
          %s1460 = smul.addr %s1459, 64
          %s1461 = scalar_lea.vmem [#allocation2], %s1460
          %1462 = dma.done %s1458, 1024
        $region48: #{tpu_custom_call.1} parent=43 // pred_fallthru
          _
      $region44: #{tpu_custom_call.1} parent=5 // pred_fallthru
        _
    $region6: #{tpu_custom_call.1} parent=1 // loop_footer
      %s17 = sadd.s32 1, %s13
    $region7: #{tpu_custom_call.1} parent=1 // loop_footer_branch
      %12 = sbr.rel target = $region3
    $region8: #{tpu_custom_call.1} parent=1 // loop_exit
      _
    %1463 = vsyncpa [#allocation3], 1
    %s1464 = scalar_lea.sflag [#allocation3], 1
    %1465 = vsyncpa %s1464, 1

</llo_original>
